<compile_context>
chip_gen: v7x
topology: tpu7x:2x2x1
jax: 0.10.0
libtpu: 0.0.40
codegen_flags: <defaults>
</compile_context>

<pallas_src>
import functools

import jax
import jax.numpy as jnp
from jax.experimental import pallas as pl
from jax.experimental.pallas import tpu as pltpu

LANE = 128           # hidden feature dims are padded to a multiple of this
SUBLANE_BF16 = 16    # bf16 vreg is [16, 128]: batch tiles are multiples of 16
MAX_BATCH_TILE = 1024  # big tiles amortize the ~0.35us per-grid-step overhead


def _round_up(x, m):
    return ((x + m - 1) // m) * m


def _cdiv(a, b):
    return -(-a // b)


def generator_mlp_kernel(x_ref,
                         w1_ref, b1_ref,
                         w2_ref, b2_ref,
                         w3_ref, b3_ref,
                         w4_ref, b4_ref,
                         o_ref):
    """Fused (Linear+ReLU) x3 -> Linear -> Tanh.

    Layers 1-3: bf16 MXU matmuls, f32 accumulate / bias / ReLU.
    Layer 4 (pre-tanh): fully f32 for parity with the f32 PyTorch model.
    """
    x = x_ref[...].astype(jnp.bfloat16)            # cast in VMEM (no HBM pass)
    h = jnp.dot(x, w1_ref[...], preferred_element_type=jnp.float32) + b1_ref[...]
    h = jnp.maximum(h, 0.0).astype(jnp.bfloat16)
    h = jnp.dot(h, w2_ref[...], preferred_element_type=jnp.float32) + b2_ref[...]
    h = jnp.maximum(h, 0.0).astype(jnp.bfloat16)
    h = jnp.dot(h, w3_ref[...], preferred_element_type=jnp.float32) + b3_ref[...]
    h = jnp.maximum(h, 0.0)                        # stays f32 into the last layer
    h = jnp.dot(h, w4_ref[...], preferred_element_type=jnp.float32) + b4_ref[...]
    o_ref[...] = jnp.tanh(h).astype(o_ref.dtype)   # f32 tanh on the EUP


def init_generator_params(key, input_dim, output_dim, hidden_dim=128):
    """PyTorch-Linear-style init (uniform +/- 1/sqrt(fan_in)).
    Weights stored transposed: (in_features, out_features), f32."""
    dims = [(input_dim, hidden_dim),
            (hidden_dim, hidden_dim * 2),
            (hidden_dim * 2, hidden_dim),
            (hidden_dim, output_dim)]
    params = []
    for fan_in, fan_out in dims:
        key, kw, kb = jax.random.split(key, 3)
        bound = 1.0 / jnp.sqrt(jnp.float32(fan_in))
        w = jax.random.uniform(kw, (fan_in, fan_out), jnp.float32, -bound, bound)
        b = jax.random.uniform(kb, (fan_out,), jnp.float32, -bound, bound)
        params.append((w, b))
    return params


def prepare_params(params):
    """Pad only the *hidden* feature dims to multiples of 128.

    The network input dim (rows of w1) and output dim (cols of w4) are kept at
    their true sizes so the kernel reads x and writes the output without any
    wrapper-side pad/slice HBM passes.  Padded weight rows/cols and bias lanes
    are zero, so padded hidden lanes stay exactly zero through ReLU.
    Layers 1-3 weights -> bf16 (MXU-native); layer-4 weights stay f32."""
    (w1, b1), (w2, b2), (w3, b3), (w4, b4) = params
    din, dout = w1.shape[0], w4.shape[1]
    h1p = _round_up(w1.shape[1], LANE)
    h2p = _round_up(w2.shape[1], LANE)
    h3p = _round_up(w3.shape[1], LANE)

    def pad_w(w, rows, cols, dtype):
        out = jnp.zeros((rows, cols), dtype)
        return out.at[:w.shape[0], :w.shape[1]].set(w.astype(dtype))

    def pad_b(b, cols):
        out = jnp.zeros((1, cols), jnp.float32)
        return out.at[0, :b.shape[0]].set(b)

    return [
        (pad_w(w1, din, h1p, jnp.bfloat16), pad_b(b1, h1p)),
        (pad_w(w2, h1p, h2p, jnp.bfloat16), pad_b(b2, h2p)),
        (pad_w(w3, h2p, h3p, jnp.bfloat16), pad_b(b3, h3p)),
        (pad_w(w4, h3p, dout, jnp.float32), pad_b(b4, dout)),
    ]


@functools.partial(jax.jit, static_argnames=("block_batch",))
def generator_forward(x, prepared_params, block_batch=MAX_BATCH_TILE):
    """x: (B, input_dim) f32.  prepared_params: from prepare_params()."""
    (w1, b1), (w2, b2), (w3, b3), (w4, b4) = prepared_params
    B, din = x.shape
    dout = w4.shape[1]

    # Batch tiling:
    #  - tiny B: a single block covering the whole array (no padding, no masks)
    #  - otherwise: balanced tiles, multiples of 16 (bf16 sublane packing),
    #    with >= 2 grid steps so v7x's two TensorCores both get work.
    if B <= 2 * SUBLANE_BF16:
        tb = B
    else:
        n_steps = max(2, _cdiv(B, block_batch))
        tb = min(_round_up(_cdiv(B, n_steps), SUBLANE_BF16),
                 _round_up(B, SUBLANE_BF16))
    grid = (_cdiv(B, tb),)

    weight_ops = (w1, b1, w2, b2, w3, b3, w4, b4)

    # x / out pipeline along the batch grid; weights & biases stay resident
    # (constant index_maps -> no re-fetch across grid steps).
    x_spec = pl.BlockSpec((tb, din), lambda i: (i, 0))
    out_spec = pl.BlockSpec((tb, dout), lambda i: (i, 0))
    resident = lambda a: pl.BlockSpec(a.shape, lambda i: (0, 0))

    layer_dims = [(w.shape[0], w.shape[1]) for w in (w1, w2, w3, w4)]
    b_cov = grid[0] * tb
    flops = 2 * b_cov * sum(k * n for k, n in layer_dims)
    bytes_accessed = (int(x.size) * x.dtype.itemsize
                      + sum(int(a.size) * a.dtype.itemsize for a in weight_ops)
                      + B * dout * 4)
    cost = pl.CostEstimate(flops=int(flops),
                           transcendentals=int(b_cov * dout),
                           bytes_accessed=int(bytes_accessed))

    out = pl.pallas_call(
        generator_mlp_kernel,
        out_shape=jax.ShapeDtypeStruct((B, dout), jnp.float32),
        grid=grid,
        in_specs=[x_spec] + [resident(a) for a in weight_ops],
        out_specs=out_spec,
        compiler_params=pltpu.CompilerParams(
            dimension_semantics=("parallel",)),
        cost_estimate=cost,
    )(x, *weight_ops)
    return out


def generator_reference(x, params):
    """Pure-JAX f32 reference for correctness checking."""
    h = x
    for i, (w, b) in enumerate(params):
        h = h @ w + b
        h = jnp.maximum(h, 0.0) if i < len(params) - 1 else jnp.tanh(h)
    return h


if __name__ == "__main__":
    # Small shapes consistent with the module: batch=8, input_dim=16,
    # hidden_dim=32 (-> 64 in the middle layer), output_dim=16.
    batch, input_dim, output_dim, hidden_dim = 8, 16, 16, 32

    key = jax.random.PRNGKey(0)
    key, kx, kx2 = jax.random.split(key, 3)
    params = init_generator_params(key, input_dim, output_dim, hidden_dim)
    prepared = prepare_params(params)

    # Case 1: tiny batch -> single full-array block.
    x = jax.random.normal(kx, (batch, input_dim), jnp.float32)
    out = jax.block_until_ready(generator_forward(x, prepared))
    ref = generator_reference(x, params)
    assert out.shape == (batch, output_dim), out.shape
    assert jnp.allclose(out, ref, atol=2e-2, rtol=2e-2), "mismatch (tiny batch)"

    # Case 2: larger batch -> 2 grid steps, uneven (masked) final block.
    batch2 = 40
    x2 = jax.random.normal(kx2, (batch2, input_dim), jnp.float32)
    out2 = jax.block_until_ready(generator_forward(x2, prepared))
    ref2 = generator_reference(x2, params)
    assert out2.shape == (batch2, output_dim), out2.shape
    assert jnp.allclose(out2, ref2, atol=2e-2, rtol=2e-2), "mismatch (tiled batch)"

    print("KERNEL_OK")
</pallas_src>

<mosaic_0001>
module attributes {stable_mosaic.version = 11 : i64} {
  func.func @generator_mlp_kernel(%arg0: i32, %arg1: memref<8x16xf32, #tpu.memory_space<vmem>>, %arg2: memref<16x128xbf16, #tpu.memory_space<vmem>>, %arg3: memref<1x128xf32, #tpu.memory_space<vmem>>, %arg4: memref<128x128xbf16, #tpu.memory_space<vmem>>, %arg5: memref<1x128xf32, #tpu.memory_space<vmem>>, %arg6: memref<128x128xbf16, #tpu.memory_space<vmem>>, %arg7: memref<1x128xf32, #tpu.memory_space<vmem>>, %arg8: memref<128x16xf32, #tpu.memory_space<vmem>>, %arg9: memref<1x16xf32, #tpu.memory_space<vmem>>, %arg10: memref<8x16xf32, #tpu.memory_space<vmem>>) attributes {dimension_semantics = [#tpu.dimension_semantics<parallel>], iteration_bounds = array<i64: 1>, scalar_prefetch = 0 : i64, scratch_operands = 0 : i64, tpu.core_type = #tpu.core_type<tc>, window_params = [{transform_indices = @transform_0, window_bounds = array<i64: 8, 16>}, {pipeline_mode = #tpu.pipeline_mode<synchronous>, transform_indices = @transform_1, window_bounds = array<i64: 16, 128>}, {pipeline_mode = #tpu.pipeline_mode<synchronous>, transform_indices = @transform_2, window_bounds = array<i64: 1, 128>}, {pipeline_mode = #tpu.pipeline_mode<synchronous>, transform_indices = @transform_3, window_bounds = array<i64: 128, 128>}, {pipeline_mode = #tpu.pipeline_mode<synchronous>, transform_indices = @transform_4, window_bounds = array<i64: 1, 128>}, {pipeline_mode = #tpu.pipeline_mode<synchronous>, transform_indices = @transform_5, window_bounds = array<i64: 128, 128>}, {pipeline_mode = #tpu.pipeline_mode<synchronous>, transform_indices = @transform_6, window_bounds = array<i64: 1, 128>}, {pipeline_mode = #tpu.pipeline_mode<synchronous>, transform_indices = @transform_7, window_bounds = array<i64: 128, 16>}, {pipeline_mode = #tpu.pipeline_mode<synchronous>, transform_indices = @transform_8, window_bounds = array<i64: 1, 16>}, {transform_indices = @transform_9, window_bounds = array<i64: 8, 16>}]} {
    %c0 = arith.constant 0 : index
    %c0_0 = arith.constant 0 : index
    %0 = vector.load %arg1[%c0, %c0_0] : memref<8x16xf32, #tpu.memory_space<vmem>>, vector<8x16xf32>
    %1 = arith.truncf %0 : vector<8x16xf32> to vector<8x16xbf16>
    %c0_1 = arith.constant 0 : index
    %c0_2 = arith.constant 0 : index
    %2 = vector.load %arg2[%c0_1, %c0_2] : memref<16x128xbf16, #tpu.memory_space<vmem>>, vector<16x128xbf16>
    %cst = arith.constant dense<0.000000e+00> : vector<8x128xf32>
    %3 = tpu.matmul %1, %2, %cst {dimension_numbers = #tpu.dot_dimension_numbers<[1], [0], [0], [1], [0, 0, 1, 1], [], []>} : vector<8x16xbf16>, vector<16x128xbf16>, vector<8x128xf32> -> vector<8x128xf32>
    %c0_3 = arith.constant 0 : index
    %c0_4 = arith.constant 0 : index
    %4 = vector.load %arg3[%c0_3, %c0_4] : memref<1x128xf32, #tpu.memory_space<vmem>>, vector<1x128xf32>
    %5 = vector.broadcast %4 : vector<1x128xf32> to vector<8x128xf32>
    %6 = arith.addf %3, %5 : vector<8x128xf32>
    %cst_5 = arith.constant 0.000000e+00 : f32
    %7 = vector.broadcast %cst_5 : f32 to vector<8x128xf32>
    %8 = arith.maximumf %6, %7 : vector<8x128xf32>
    %9 = arith.truncf %8 : vector<8x128xf32> to vector<8x128xbf16>
    %c0_6 = arith.constant 0 : index
    %c0_7 = arith.constant 0 : index
    %10 = vector.load %arg4[%c0_6, %c0_7] : memref<128x128xbf16, #tpu.memory_space<vmem>>, vector<128x128xbf16>
    %cst_8 = arith.constant dense<0.000000e+00> : vector<8x128xf32>
    %11 = tpu.matmul %9, %10, %cst_8 {dimension_numbers = #tpu.dot_dimension_numbers<[1], [0], [0], [1], [0, 0, 1, 1], [], []>} : vector<8x128xbf16>, vector<128x128xbf16>, vector<8x128xf32> -> vector<8x128xf32>
    %c0_9 = arith.constant 0 : index
    %c0_10 = arith.constant 0 : index
    %12 = vector.load %arg5[%c0_9, %c0_10] : memref<1x128xf32, #tpu.memory_space<vmem>>, vector<1x128xf32>
    %13 = vector.broadcast %12 : vector<1x128xf32> to vector<8x128xf32>
    %14 = arith.addf %11, %13 : vector<8x128xf32>
    %cst_11 = arith.constant 0.000000e+00 : f32
    %15 = vector.broadcast %cst_11 : f32 to vector<8x128xf32>
    %16 = arith.maximumf %14, %15 : vector<8x128xf32>
    %17 = arith.truncf %16 : vector<8x128xf32> to vector<8x128xbf16>
    %c0_12 = arith.constant 0 : index
    %c0_13 = arith.constant 0 : index
    %18 = vector.load %arg6[%c0_12, %c0_13] : memref<128x128xbf16, #tpu.memory_space<vmem>>, vector<128x128xbf16>
    %cst_14 = arith.constant dense<0.000000e+00> : vector<8x128xf32>
    %19 = tpu.matmul %17, %18, %cst_14 {dimension_numbers = #tpu.dot_dimension_numbers<[1], [0], [0], [1], [0, 0, 1, 1], [], []>} : vector<8x128xbf16>, vector<128x128xbf16>, vector<8x128xf32> -> vector<8x128xf32>
    %c0_15 = arith.constant 0 : index
    %c0_16 = arith.constant 0 : index
    %20 = vector.load %arg7[%c0_15, %c0_16] : memref<1x128xf32, #tpu.memory_space<vmem>>, vector<1x128xf32>
    %21 = vector.broadcast %20 : vector<1x128xf32> to vector<8x128xf32>
    %22 = arith.addf %19, %21 : vector<8x128xf32>
    %cst_17 = arith.constant 0.000000e+00 : f32
    %23 = vector.broadcast %cst_17 : f32 to vector<8x128xf32>
    %24 = arith.maximumf %22, %23 : vector<8x128xf32>
    %c0_18 = arith.constant 0 : index
    %c0_19 = arith.constant 0 : index
    %25 = vector.load %arg8[%c0_18, %c0_19] : memref<128x16xf32, #tpu.memory_space<vmem>>, vector<128x16xf32>
    %cst_20 = arith.constant dense<0.000000e+00> : vector<8x16xf32>
    %26 = tpu.matmul %24, %25, %cst_20 {dimension_numbers = #tpu.dot_dimension_numbers<[1], [0], [0], [1], [0, 0, 1, 1], [], []>} : vector<8x128xf32>, vector<128x16xf32>, vector<8x16xf32> -> vector<8x16xf32>
    %c0_21 = arith.constant 0 : index
    %c0_22 = arith.constant 0 : index
    %27 = vector.load %arg9[%c0_21, %c0_22] : memref<1x16xf32, #tpu.memory_space<vmem>>, vector<1x16xf32>
    %28 = vector.broadcast %27 : vector<1x16xf32> to vector<8x16xf32>
    %29 = arith.addf %26, %28 : vector<8x16xf32>
    %30 = math.tanh %29 : vector<8x16xf32>
    %c0_23 = arith.constant 0 : index
    %c0_24 = arith.constant 0 : index
    %31 = vector.load %arg10[%c0_23, %c0_24] : memref<8x16xf32, #tpu.memory_space<vmem>>, vector<8x16xf32>
    tpu.vector_store %arg10[%c0_23, %c0_24], %30 {strides = array<i32>} : memref<8x16xf32, #tpu.memory_space<vmem>>, vector<8x16xf32>,
    return
  }
  func.func @transform_0(%arg0: i32) -> (i32, i32) {
    %c0_i32 = arith.constant 0 : i32
    %c0_i32_0 = arith.constant 0 : i32
    return %arg0, %c0_i32 : i32, i32
  }
  func.func @transform_1(%arg0: i32) -> (i32, i32) {
    %c0_i32 = arith.constant 0 : i32
    %c0_i32_0 = arith.constant 0 : i32
    %c0_i32_1 = arith.constant 0 : i32
    return %c0_i32, %c0_i32_0 : i32, i32
  }
  func.func @transform_2(%arg0: i32) -> (i32, i32) {
    %c0_i32 = arith.constant 0 : i32
    %c0_i32_0 = arith.constant 0 : i32
    %c0_i32_1 = arith.constant 0 : i32
    return %c0_i32, %c0_i32_0 : i32, i32
  }
  func.func @transform_3(%arg0: i32) -> (i32, i32) {
    %c0_i32 = arith.constant 0 : i32
    %c0_i32_0 = arith.constant 0 : i32
    %c0_i32_1 = arith.constant 0 : i32
    return %c0_i32, %c0_i32_0 : i32, i32
  }
  func.func @transform_4(%arg0: i32) -> (i32, i32) {
    %c0_i32 = arith.constant 0 : i32
    %c0_i32_0 = arith.constant 0 : i32
    %c0_i32_1 = arith.constant 0 : i32
    return %c0_i32, %c0_i32_0 : i32, i32
  }
  func.func @transform_5(%arg0: i32) -> (i32, i32) {
    %c0_i32 = arith.constant 0 : i32
    %c0_i32_0 = arith.constant 0 : i32
    %c0_i32_1 = arith.constant 0 : i32
    return %c0_i32, %c0_i32_0 : i32, i32
  }
  func.func @transform_6(%arg0: i32) -> (i32, i32) {
    %c0_i32 = arith.constant 0 : i32
    %c0_i32_0 = arith.constant 0 : i32
    %c0_i32_1 = arith.constant 0 : i32
    return %c0_i32, %c0_i32_0 : i32, i32
  }
  func.func @transform_7(%arg0: i32) -> (i32, i32) {
    %c0_i32 = arith.constant 0 : i32
    %c0_i32_0 = arith.constant 0 : i32
    %c0_i32_1 = arith.constant 0 : i32
    return %c0_i32, %c0_i32_0 : i32, i32
  }
  func.func @transform_8(%arg0: i32) -> (i32, i32) {
    %c0_i32 = arith.constant 0 : i32
    %c0_i32_0 = arith.constant 0 : i32
    %c0_i32_1 = arith.constant 0 : i32
    return %c0_i32, %c0_i32_0 : i32, i32
  }
  func.func @transform_9(%arg0: i32) -> (i32, i32) {
    %c0_i32 = arith.constant 0 : i32
    %c0_i32_0 = arith.constant 0 : i32
    return %arg0, %c0_i32 : i32, i32
  }
}

</mosaic_0001>

<llo_original>
// kernel: generator_forward.1
$region0: #{generator_forward.1}
  #allocation0 [shape = 'u32[]', space=smem, size = 0x4, offset = 0x4, fixed_abs, tag = 'smem constant byte address 0x4 - core index']
  #allocation1 [shape = 'u32[144,128]{1,0:T(1,128)}', space=vmem, size = 0x12000, scoped, tag = 'internal scratch']
  %s0 = inlined_call_operand.vmem [shape: f32[8,16], index: 0, kind: input, shape index: {}]
  %s1 = inlined_call_operand.vmem [shape: bf16[16,128], index: 1, kind: input, shape index: {}]
  %s2 = inlined_call_operand.vmem [shape: f32[1,128], index: 2, kind: input, shape index: {}]
  %s3 = inlined_call_operand.vmem [shape: bf16[128,128], index: 3, kind: input, shape index: {}]
  %s4 = inlined_call_operand.vmem [shape: f32[1,128], index: 4, kind: input, shape index: {}]
  %s5 = inlined_call_operand.vmem [shape: bf16[128,128], index: 5, kind: input, shape index: {}]
  %s6 = inlined_call_operand.vmem [shape: f32[1,128], index: 6, kind: input, shape index: {}]
  %s7 = inlined_call_operand.vmem [shape: f32[128,16], index: 7, kind: input, shape index: {}]
  %s8 = inlined_call_operand.vmem [shape: f32[1,16], index: 8, kind: input, shape index: {}]
  %s9 = inlined_call_operand.hbm [shape: f32[8,16], index: 9, kind: output, shape index: {}]
  %s10 = sld [smem:[#allocation0]]
  $region46: #{generator_forward.1} parent=0
    _
  %s12 = ssub.s32 1, %s10
  %s13 = scalar_select 0, %s12, %s10
  $region1: #{generator_forward.1} parent=0
    #allocation2 [shape = 'u8[4096]{0}', space=vmem, size = 0x1000, scoped, tag = 'output window, operand 0, single buffered']
    #allocation3 [shape = 's32[1]{0}', space=sflag, size = 0x4, scoped, tag = 'scoped memory for generator_forward.1']
    %14 = vsyncpa [#allocation3], 0
    // Predicated region
    $region2: #{generator_forward.1} parent=1 // pred_check
      _
    $region3: #{generator_forward.1} parent=1 // pred_check_branch
      %16 = sbr.rel (0) target = $region5
    $region4: #{generator_forward.1} parent=1 // pred_region
      _
    $region5: #{generator_forward.1} parent=1 // pred_fallthru
      _
    // Predicated region
    $region6: #{generator_forward.1} parent=1 // pred_check
      _
    $region7: #{generator_forward.1} parent=1 // pred_check_branch
      %18 = sbr.rel (0) target = $region9
    $region8: #{generator_forward.1} parent=1 // pred_region
      _
    $region9: #{generator_forward.1} parent=1 // pred_fallthru
      _
    // Predicated region
    $region10: #{generator_forward.1} parent=1 // pred_check
      _
    $region11: #{generator_forward.1} parent=1 // pred_check_branch
      %20 = sbr.rel (0) target = $region13
    $region12: #{generator_forward.1} parent=1 // pred_region
      _
    $region13: #{generator_forward.1} parent=1 // pred_fallthru
      _
    // Predicated region
    $region14: #{generator_forward.1} parent=1 // pred_check
      _
    $region15: #{generator_forward.1} parent=1 // pred_check_branch
      %22 = sbr.rel (0) target = $region17
    $region16: #{generator_forward.1} parent=1 // pred_region
      _
    $region17: #{generator_forward.1} parent=1 // pred_fallthru
      _
    // Predicated region
    $region18: #{generator_forward.1} parent=1 // pred_check
      _
    $region19: #{generator_forward.1} parent=1 // pred_check_branch
      %24 = sbr.rel (0) target = $region21
    $region20: #{generator_forward.1} parent=1 // pred_region
      _
    $region21: #{generator_forward.1} parent=1 // pred_fallthru
      _
    // Predicated region
    $region22: #{generator_forward.1} parent=1 // pred_check
      _
    $region23: #{generator_forward.1} parent=1 // pred_check_branch
      %26 = sbr.rel (0) target = $region25
    $region24: #{generator_forward.1} parent=1 // pred_region
      _
    $region25: #{generator_forward.1} parent=1 // pred_fallthru
      _
    // Predicated region
    $region26: #{generator_forward.1} parent=1 // pred_check
      _
    $region27: #{generator_forward.1} parent=1 // pred_check_branch
      %28 = sbr.rel (0) target = $region29
    $region28: #{generator_forward.1} parent=1 // pred_region
      _
    $region29: #{generator_forward.1} parent=1 // pred_fallthru
      _
    // Predicated region
    $region30: #{generator_forward.1} parent=1 // pred_check
      _
    $region31: #{generator_forward.1} parent=1 // pred_check_branch
      %30 = sbr.rel (0) target = $region33
    $region32: #{generator_forward.1} parent=1 // pred_region
      _
    $region33: #{generator_forward.1} parent=1 // pred_fallthru
      _
    // Predicated region
    $region34: #{generator_forward.1} parent=1 // pred_check
      _
    $region35: #{generator_forward.1} parent=1 // pred_check_branch
      %32 = sbr.rel (0) target = $region37
    $region36: #{generator_forward.1} parent=1 // pred_region
      _
    $region37: #{generator_forward.1} parent=1 // pred_fallthru
      _
    %v34 = vld [vmem:[%s0] sm:$0xff]
    %v35 = vpack.c.bf16 %v34, %v34
    %v36 = vld [vmem:[%s1] sm:$0xf]
    %v37 = vld [vmem:[%s1 + $0x4] sm:$0xf]
    %v38 = vld [vmem:[%s2] sm:$0x1]
    %v40 = vlaneseq
    %v41 = vshrl.u32 %v40, 7
    %v42 = vsub.s32 0, %v41
    %v43 = vrot.slane %v38, %v42
    %v47 = vunpack.c.l.b16 %v36
    %v48 = vunpack.c.l.b16 %v37
    %v49 = vpack.c.b16 %v48, %v47
    %vm51 = vcmask 130048
    %v53 = vsel %vm51, %v35, 0
    %55 = vmatprep.subr.bf16.mxu0 0
    %56 = vmatpush1.bf16.msra.mxu0 %v49
    %57 = vmatprep.subr.bf16.mxu0 0
    %58 = vmatpush1.bf16.msra.mxu0 0
    %59 = vmatprep.subr.bf16.mxu0 0
    %60 = vmatpush1.bf16.msra.mxu0 0
    %61 = vmatprep.subr.bf16.mxu0 0
    %62 = vmatpush1.bf16.msra.mxu0 0
    %63 = vmatprep.subr.bf16.mxu0 0
    %64 = vmatpush1.bf16.msra.mxu0 0
    %65 = vmatprep.subr.bf16.mxu0 0
    %66 = vmatpush1.bf16.msra.mxu0 0
    %67 = vmatprep.subr.bf16.mxu0 0
    %68 = vmatpush1.bf16.msra.mxu0 0
    %69 = vmatprep.subr.bf16.mxu0 0
    %70 = vmatpush1.bf16.msra.mxu0 0
    %71 = vmatprep.subr.bf16.mxu0 0
    %72 = vmatpush1.bf16.msra.mxu0 0
    %73 = vmatprep.subr.bf16.mxu0 0
    %74 = vmatpush1.bf16.msra.mxu0 0
    %75 = vmatprep.subr.bf16.mxu0 0
    %76 = vmatpush1.bf16.msra.mxu0 0
    %77 = vmatprep.subr.bf16.mxu0 0
    %78 = vmatpush1.bf16.msra.mxu0 0
    %79 = vmatprep.subr.bf16.mxu0 0
    %80 = vmatpush1.bf16.msra.mxu0 0
    %81 = vmatprep.subr.bf16.mxu0 0
    %82 = vmatpush1.bf16.msra.mxu0 0
    %83 = vmatprep.subr.bf16.mxu0 0
    %84 = vmatpush1.bf16.msra.mxu0 0
    %85 = vmatprep.subr.bf16.mxu0 0
    %86 = vmatpush1.bf16.msra.mxu0 0
    %87 = vmatprep.mubr.bf16.mxu0 0
    %88 = vmatmul.mubr.bf16.gmra.mrb[0].mxu0 %v53
    %v89 = vpop.f32.mrb[0].mxu0
    %v90 = vadd.f32 %v43, %v89
    %v91 = vpop.f32.mrb[0].mxu0
    %v92 = vpop.f32.mrb[0].mxu0
    %v93 = vpop.f32.mrb[0].mxu0
    %94 = vdwg.mxu0
    %v95 = vmax.f32 %v90, 0.0
    %v96 = vpack.c.bf16 %v95, %v95
    %v97 = vld [vmem:[%s3] sm:$0xf]
    %v98 = vld [vmem:[%s3 + $0x4] sm:$0xf]
    %v99 = vld [vmem:[%s3 + $0x8] sm:$0xf]
    %v100 = vld [vmem:[%s3 + $0xc] sm:$0xf]
    %v101 = vld [vmem:[%s3 + $0x10] sm:$0xf]
    %v102 = vld [vmem:[%s3 + $0x14] sm:$0xf]
    %v103 = vld [vmem:[%s3 + $0x18] sm:$0xf]
    %v104 = vld [vmem:[%s3 + $0x1c] sm:$0xf]
    %v105 = vld [vmem:[%s3 + $0x20] sm:$0xf]
    %v106 = vld [vmem:[%s3 + $0x24] sm:$0xf]
    %v107 = vld [vmem:[%s3 + $0x28] sm:$0xf]
    %v108 = vld [vmem:[%s3 + $0x2c] sm:$0xf]
    %v109 = vld [vmem:[%s3 + $0x30] sm:$0xf]
    %v110 = vld [vmem:[%s3 + $0x34] sm:$0xf]
    %v111 = vld [vmem:[%s3 + $0x38] sm:$0xf]
    %v112 = vld [vmem:[%s3 + $0x3c] sm:$0xf]
    %v113 = vld [vmem:[%s4] sm:$0x1]
    %v115 = vlaneseq
    %v116 = vshrl.u32 %v115, 7
    %v117 = vsub.s32 0, %v116
    %v118 = vrot.slane %v113, %v117
    %v136 = vunpack.c.l.b16 %v97
    %v137 = vunpack.c.l.b16 %v98
    %v138 = vunpack.c.l.b16 %v99
    %v139 = vunpack.c.l.b16 %v100
    %v140 = vunpack.c.l.b16 %v101
    %v141 = vunpack.c.l.b16 %v102
    %v142 = vunpack.c.l.b16 %v103
    %v143 = vunpack.c.l.b16 %v104
    %v144 = vunpack.c.l.b16 %v105
    %v145 = vunpack.c.l.b16 %v106
    %v146 = vunpack.c.l.b16 %v107
    %v147 = vunpack.c.l.b16 %v108
    %v148 = vunpack.c.l.b16 %v109
    %v149 = vunpack.c.l.b16 %v110
    %v150 = vunpack.c.l.b16 %v111
    %v151 = vunpack.c.l.b16 %v112
    %v152 = vpack.c.b16 %v137, %v136
    %v153 = vpack.c.b16 %v139, %v138
    %v154 = vpack.c.b16 %v141, %v140
    %v155 = vpack.c.b16 %v143, %v142
    %v156 = vpack.c.b16 %v145, %v144
    %v157 = vpack.c.b16 %v147, %v146
    %v158 = vpack.c.b16 %v149, %v148
    %v159 = vpack.c.b16 %v151, %v150
    %168 = vmatprep.subr.bf16.mxu0 0
    %169 = vmatpush1.bf16.msra.mxu0 %v152
    %170 = vmatprep.subr.bf16.mxu0 0
    %171 = vmatpush1.bf16.msra.mxu0 %v153
    %172 = vmatprep.subr.bf16.mxu0 0
    %173 = vmatpush1.bf16.msra.mxu0 %v154
    %174 = vmatprep.subr.bf16.mxu0 0
    %175 = vmatpush1.bf16.msra.mxu0 %v155
    %176 = vmatprep.subr.bf16.mxu0 0
    %177 = vmatpush1.bf16.msra.mxu0 %v156
    %178 = vmatprep.subr.bf16.mxu0 0
    %179 = vmatpush1.bf16.msra.mxu0 %v157
    %180 = vmatprep.subr.bf16.mxu0 0
    %181 = vmatpush1.bf16.msra.mxu0 %v158
    %182 = vmatprep.subr.bf16.mxu0 0
    %183 = vmatpush1.bf16.msra.mxu0 %v159
    %184 = vmatprep.subr.bf16.mxu0 0
    %185 = vmatpush1.bf16.msra.mxu0 0
    %186 = vmatprep.subr.bf16.mxu0 0
    %187 = vmatpush1.bf16.msra.mxu0 0
    %188 = vmatprep.subr.bf16.mxu0 0
    %189 = vmatpush1.bf16.msra.mxu0 0
    %190 = vmatprep.subr.bf16.mxu0 0
    %191 = vmatpush1.bf16.msra.mxu0 0
    %192 = vmatprep.subr.bf16.mxu0 0
    %193 = vmatpush1.bf16.msra.mxu0 0
    %194 = vmatprep.subr.bf16.mxu0 0
    %195 = vmatpush1.bf16.msra.mxu0 0
    %196 = vmatprep.subr.bf16.mxu0 0
    %197 = vmatpush1.bf16.msra.mxu0 0
    %198 = vmatprep.subr.bf16.mxu0 0
    %199 = vmatpush1.bf16.msra.mxu0 0
    %200 = vmatprep.mubr.bf16.mxu0 0
    %201 = vmatmul.mubr.bf16.gmra.mrb[0].mxu0 %v96
    %v202 = vpop.f32.mrb[0].mxu0
    %v203 = vadd.f32 %v118, %v202
    %v204 = vpop.f32.mrb[0].mxu0
    %v205 = vpop.f32.mrb[0].mxu0
    %v206 = vpop.f32.mrb[0].mxu0
    %207 = vdwg.mxu0
    %v208 = vmax.f32 %v203, 0.0
    %v209 = vpack.c.bf16 %v208, %v208
    %v210 = vld [vmem:[%s5] sm:$0xf]
    %v211 = vld [vmem:[%s5 + $0x4] sm:$0xf]
    %v212 = vld [vmem:[%s5 + $0x8] sm:$0xf]
    %v213 = vld [vmem:[%s5 + $0xc] sm:$0xf]
    %v214 = vld [vmem:[%s5 + $0x10] sm:$0xf]
    %v215 = vld [vmem:[%s5 + $0x14] sm:$0xf]
    %v216 = vld [vmem:[%s5 + $0x18] sm:$0xf]
    %v217 = vld [vmem:[%s5 + $0x1c] sm:$0xf]
    %v218 = vld [vmem:[%s5 + $0x20] sm:$0xf]
    %v219 = vld [vmem:[%s5 + $0x24] sm:$0xf]
    %v220 = vld [vmem:[%s5 + $0x28] sm:$0xf]
    %v221 = vld [vmem:[%s5 + $0x2c] sm:$0xf]
    %v222 = vld [vmem:[%s5 + $0x30] sm:$0xf]
    %v223 = vld [vmem:[%s5 + $0x34] sm:$0xf]
    %v224 = vld [vmem:[%s5 + $0x38] sm:$0xf]
    %v225 = vld [vmem:[%s5 + $0x3c] sm:$0xf]
    %v226 = vld [vmem:[%s6] sm:$0x1]
    %v228 = vlaneseq
    %v229 = vshrl.u32 %v228, 7
    %v230 = vsub.s32 0, %v229
    %v231 = vrot.slane %v226, %v230
    %v249 = vunpack.c.l.b16 %v210
    %v250 = vunpack.c.l.b16 %v211
    %v251 = vunpack.c.l.b16 %v212
    %v252 = vunpack.c.l.b16 %v213
    %v253 = vunpack.c.l.b16 %v214
    %v254 = vunpack.c.l.b16 %v215
    %v255 = vunpack.c.l.b16 %v216
    %v256 = vunpack.c.l.b16 %v217
    %v257 = vunpack.c.l.b16 %v218
    %v258 = vunpack.c.l.b16 %v219
    %v259 = vunpack.c.l.b16 %v220
    %v260 = vunpack.c.l.b16 %v221
    %v261 = vunpack.c.l.b16 %v222
    %v262 = vunpack.c.l.b16 %v223
    %v263 = vunpack.c.l.b16 %v224
    %v264 = vunpack.c.l.b16 %v225
    %v265 = vpack.c.b16 %v250, %v249
    %v266 = vpack.c.b16 %v252, %v251
    %v267 = vpack.c.b16 %v254, %v253
    %v268 = vpack.c.b16 %v256, %v255
    %v269 = vpack.c.b16 %v258, %v257
    %v270 = vpack.c.b16 %v260, %v259
    %v271 = vpack.c.b16 %v262, %v261
    %v272 = vpack.c.b16 %v264, %v263
    %281 = vmatprep.subr.bf16.mxu0 0
    %282 = vmatpush1.bf16.msra.mxu0 %v265
    %283 = vmatprep.subr.bf16.mxu0 0
    %284 = vmatpush1.bf16.msra.mxu0 %v266
    %285 = vmatprep.subr.bf16.mxu0 0
    %286 = vmatpush1.bf16.msra.mxu0 %v267
    %287 = vmatprep.subr.bf16.mxu0 0
    %288 = vmatpush1.bf16.msra.mxu0 %v268
    %289 = vmatprep.subr.bf16.mxu0 0
    %290 = vmatpush1.bf16.msra.mxu0 %v269
    %291 = vmatprep.subr.bf16.mxu0 0
    %292 = vmatpush1.bf16.msra.mxu0 %v270
    %293 = vmatprep.subr.bf16.mxu0 0
    %294 = vmatpush1.bf16.msra.mxu0 %v271
    %295 = vmatprep.subr.bf16.mxu0 0
    %296 = vmatpush1.bf16.msra.mxu0 %v272
    %297 = vmatprep.subr.bf16.mxu0 0
    %298 = vmatpush1.bf16.msra.mxu0 0
    %299 = vmatprep.subr.bf16.mxu0 0
    %300 = vmatpush1.bf16.msra.mxu0 0
    %301 = vmatprep.subr.bf16.mxu0 0
    %302 = vmatpush1.bf16.msra.mxu0 0
    %303 = vmatprep.subr.bf16.mxu0 0
    %304 = vmatpush1.bf16.msra.mxu0 0
    %305 = vmatprep.subr.bf16.mxu0 0
    %306 = vmatpush1.bf16.msra.mxu0 0
    %307 = vmatprep.subr.bf16.mxu0 0
    %308 = vmatpush1.bf16.msra.mxu0 0
    %309 = vmatprep.subr.bf16.mxu0 0
    %310 = vmatpush1.bf16.msra.mxu0 0
    %311 = vmatprep.subr.bf16.mxu0 0
    %312 = vmatpush1.bf16.msra.mxu0 0
    %313 = vmatprep.mubr.bf16.mxu0 0
    %314 = vmatmul.mubr.bf16.gmra.mrb[0].mxu0 %v209
    %v315 = vpop.f32.mrb[0].mxu0
    %v316 = vadd.f32 %v231, %v315
    %v317 = vpop.f32.mrb[0].mxu0
    %v318 = vpop.f32.mrb[0].mxu0
    %v319 = vpop.f32.mrb[0].mxu0
    %320 = vdwg.mxu0
    %v321 = vmax.f32 %v316, 0.0
    %v322 = vld [vmem:[%s7] sm:$0xff]
    %v323 = vld [vmem:[%s7 + $0x8] sm:$0xff]
    %v324 = vld [vmem:[%s7 + $0x10] sm:$0xff]
    %v325 = vld [vmem:[%s7 + $0x18] sm:$0xff]
    %v326 = vld [vmem:[%s7 + $0x20] sm:$0xff]
    %v327 = vld [vmem:[%s7 + $0x28] sm:$0xff]
    %v328 = vld [vmem:[%s7 + $0x30] sm:$0xff]
    %v329 = vld [vmem:[%s7 + $0x38] sm:$0xff]
    %v330 = vld [vmem:[%s7 + $0x40] sm:$0xff]
    %v331 = vld [vmem:[%s7 + $0x48] sm:$0xff]
    %v332 = vld [vmem:[%s7 + $0x50] sm:$0xff]
    %v333 = vld [vmem:[%s7 + $0x58] sm:$0xff]
    %v334 = vld [vmem:[%s7 + $0x60] sm:$0xff]
    %v335 = vld [vmem:[%s7 + $0x68] sm:$0xff]
    %v336 = vld [vmem:[%s7 + $0x70] sm:$0xff]
    %v337 = vld [vmem:[%s7 + $0x78] sm:$0xff]
    %v338 = vld [vmem:[%s8] sm:$0x1]
    %v340 = vlaneseq
    %v341 = vshrl.u32 %v340, 7
    %v342 = vsub.s32 0, %v341
    %v343 = vrot.slane %v338, %v342
    %345 = vmatprep.subr.mxu0 0.0
    %346 = vmatpush1.msra.mxu0 %v322
    %347 = vmatprep.subr.mxu0 0.0
    %348 = vmatpush1.msra.mxu0 %v323
    %349 = vmatprep.subr.mxu0 0.0
    %350 = vmatpush1.msra.mxu0 %v324
    %351 = vmatprep.subr.mxu0 0.0
    %352 = vmatpush1.msra.mxu0 %v325
    %353 = vmatprep.subr.mxu0 0.0
    %354 = vmatpush1.msra.mxu0 %v326
    %355 = vmatprep.subr.mxu0 0.0
    %356 = vmatpush1.msra.mxu0 %v327
    %357 = vmatprep.subr.mxu0 0.0
    %358 = vmatpush1.msra.mxu0 %v328
    %359 = vmatprep.subr.mxu0 0.0
    %360 = vmatpush1.msra.mxu0 %v329
    %361 = vmatprep.subr.mxu0 0.0
    %362 = vmatpush1.msra.mxu0 %v330
    %363 = vmatprep.subr.mxu0 0.0
    %364 = vmatpush1.msra.mxu0 %v331
    %365 = vmatprep.subr.mxu0 0.0
    %366 = vmatpush1.msra.mxu0 %v332
    %367 = vmatprep.subr.mxu0 0.0
    %368 = vmatpush1.msra.mxu0 %v333
    %369 = vmatprep.subr.mxu0 0.0
    %370 = vmatpush1.msra.mxu0 %v334
    %371 = vmatprep.subr.mxu0 0.0
    %372 = vmatpush1.msra.mxu0 %v335
    %373 = vmatprep.subr.mxu0 0.0
    %374 = vmatpush1.msra.mxu0 %v336
    %375 = vmatprep.subr.mxu0 0.0
    %376 = vmatpush1.msra.mxu0 %v337
    %377 = vmatprep.subr.mxu0 0.0
    %378 = vmatpush1.msra.mxu0 0.0
    %379 = vmatprep.subr.mxu0 0.0
    %380 = vmatpush1.msra.mxu0 0.0
    %381 = vmatprep.subr.mxu0 0.0
    %382 = vmatpush1.msra.mxu0 0.0
    %383 = vmatprep.subr.mxu0 0.0
    %384 = vmatpush1.msra.mxu0 0.0
    %385 = vmatprep.subr.mxu0 0.0
    %386 = vmatpush1.msra.mxu0 0.0
    %387 = vmatprep.subr.mxu0 0.0
    %388 = vmatpush1.msra.mxu0 0.0
    %389 = vmatprep.subr.mxu0 0.0
    %390 = vmatpush1.msra.mxu0 0.0
    %391 = vmatprep.subr.mxu0 0.0
    %392 = vmatpush1.msra.mxu0 0.0
    %393 = vmatprep.subr.mxu0 0.0
    %394 = vmatpush1.msra.mxu0 0.0
    %395 = vmatprep.subr.mxu0 0.0
    %396 = vmatpush1.msra.mxu0 0.0
    %397 = vmatprep.subr.mxu0 0.0
    %398 = vmatpush1.msra.mxu0 0.0
    %399 = vmatprep.subr.mxu0 0.0
    %400 = vmatpush1.msra.mxu0 0.0
    %401 = vmatprep.subr.mxu0 0.0
    %402 = vmatpush1.msra.mxu0 0.0
    %403 = vmatprep.subr.mxu0 0.0
    %404 = vmatpush1.msra.mxu0 0.0
    %405 = vmatprep.subr.mxu0 0.0
    %406 = vmatpush1.msra.mxu0 0.0
    %407 = vmatprep.subr.mxu0 0.0
    %408 = vmatpush1.msra.mxu0 0.0
    %409 = vmatprep.mubr.f32.mxu0 0.0
    %410 = vmatmul.mubr.f32.gmra.mrb[0].mxu0 %v321
    %v411 = vpop.f32.mrb[0].mxu0
    %v412 = vadd.f32 %v343, %v411
    %v413 = vpop.f32.mrb[0].mxu0
    %414 = vdwg.mxu0
    %v415 = vtanh.pop %v412
    %416 = vst.msk [vmem:[#allocation2] sm:$0xff] %vm51, %v415
    // Predicated region
    $region38: #{generator_forward.1} parent=1 // pred_check
      _
    $region39: #{generator_forward.1} parent=1 // pred_check_branch
      %418 = sbr.rel (0) target = $region41
    $region40: #{generator_forward.1} parent=1 // pred_region
      %s420 = ssub.s32 128, 128
      %421 = vsyncadd [#allocation3], %s420
      %s423 = sshll.u32 [#allocation2], 4
      %s424 = int_to_ptr.vmem [resolvable:$true] %s423
      %426 = dma.vmem_to_hbm [thread:$0]  %s424, 128, %s9, [#allocation3]
    $region41: #{generator_forward.1} parent=1 // pred_fallthru
      _
    // Predicated region
    $region42: #{generator_forward.1} parent=1 // pred_check
      _
    $region43: #{generator_forward.1} parent=1 // pred_check_branch
      %428 = sbr.rel (0) target = $region45
    $region44: #{generator_forward.1} parent=1 // pred_region
      %429 = dma.done [#allocation3], 128
    $region45: #{generator_forward.1} parent=1 // pred_fallthru
      _
    %430 = vsyncpa [#allocation3], 1

</llo_original>
